<compile_context>
chip_gen: v7x
topology: tpu7x:2x2x1
jax: 0.10.0
libtpu: 0.0.40
codegen_flags: <defaults>
</compile_context>

<pallas_src>
import functools

import jax
import jax.numpy as jnp
import numpy as np
from jax.experimental import pallas as pl
from jax.experimental.pallas import tpu as pltpu

# ---------------- config (stand-in for cfg.training.*) ----------------
CE_LOSS_ADV = False     # cfg.training.ce_loss_adv
ADV_WEIGHT = 0.1        # cfg.training.adv_weight
CLS_WEIGHT = 1.0        # cfg.training.cls_weight

# ---------------- shapes ----------------
BATCH = 8
DIM = 512               # xvector dim (from docstring)
HIDDEN = 32
NUM_CLASSES = 4         # emotion classes


# ======================= fused model + loss kernel =======================
def _fused_kernel(x_ref, lab_ref, w1_ref, b1_ref, wcat_ref, b2_ref,
                  logits_ref, loss_ref, *, ce_loss_adv):
    x = x_ref[...]                                                    # [B, D]

    # ---- model forward (all in VMEM / vregs) ----
    h = jnp.dot(x, w1_ref[...], preferred_element_type=jnp.float32) + b1_ref[...]
    h = jnp.maximum(h, 0.0)                                           # [B, H]

    # single MXU push: columns [0:D) = decoder, [D:D+C) = enc head, [D+C:D+2C) = aux head
    y = jnp.dot(h, wcat_ref[...], preferred_element_type=jnp.float32)  # [B, D+2C]
    reconst = y[:, :DIM] + b2_ref[...]                                # [B, D]
    logits = y[:, DIM:]                                               # [B, 2C]
    logits_ref[...] = logits                                          # merged logits out
    le = logits[:, :NUM_CLASSES]                                      # logits_enc
    la = logits[:, NUM_CLASSES:]                                      # logits_aux

    # ---- one-hot labels built in-kernel (VPU iota + compare) ----
    lab = lab_ref[...]                                                # [B, 1] int32
    cls_iota = jax.lax.broadcasted_iota(jnp.int32, (BATCH, NUM_CLASSES), 1)
    oh = (cls_iota == lab).astype(jnp.float32)                        # [B, C]

    # ---- reconstruction MSE: mean over all B*D elements ----
    d = x - reconst
    loss_rec = jnp.sum(d * d) * (1.0 / (BATCH * DIM))

    # ---- cross entropy (mean over batch) via log-sum-exp ----
    def ce_mean(logits_bc):
        m = jnp.max(logits_bc, axis=-1, keepdims=True)
        z = logits_bc - m
        lse = jnp.log(jnp.sum(jnp.exp(z), axis=-1, keepdims=True))
        nll = jnp.sum((lse - z) * oh, axis=-1, keepdims=True)         # -logp[label]
        return jnp.sum(nll) * (1.0 / BATCH)

    loss_enc = ce_mean(le)
    loss_cls = ce_mean(la)

    # ---- adversarial loss (branch resolved at trace time) ----
    if ce_loss_adv:
        loss_adv = -loss_cls
    else:
        m = jnp.max(la, axis=-1, keepdims=True)
        e = jnp.exp(la - m)
        inv = pl.reciprocal(jnp.sum(e, axis=-1, keepdims=True), approx=False)
        sm = e * inv
        dd = sm - (1.0 / NUM_CLASSES)
        loss_adv = jnp.sum(dd * dd) * (1.0 / (BATCH * NUM_CLASSES))

    # ---- finalize the 4 returned scalars (weights applied in-kernel) ----
    loss_ref[0] = loss_rec + loss_enc + ADV_WEIGHT * loss_adv         # main
    loss_ref[1] = loss_enc                                            # enc
    loss_ref[2] = loss_adv                                            # adv
    loss_ref[3] = CLS_WEIGHT * loss_cls                               # cls


# ======================= CustomLoss.forward =======================
@functools.partial(jax.jit, static_argnames=("ce_loss_adv",))
def custom_loss_forward(inputs, labels, params, *, ce_loss_adv=CE_LOSS_ADV):
    w1, b1, w2, b2, w3, w4 = params
    # merge decoder + two heads into one lane-dense RHS (one MXU push in-kernel)
    wcat = jnp.concatenate([w2, w3, w4], axis=1)                      # [H, D+2C]
    labels2d = labels.astype(jnp.int32).reshape(BATCH, 1)

    vmem = pl.BlockSpec(memory_space=pltpu.MemorySpace.VMEM)
    smem = pl.BlockSpec(memory_space=pltpu.MemorySpace.SMEM)

    logits_cat, terms = pl.pallas_call(
        functools.partial(_fused_kernel, ce_loss_adv=ce_loss_adv),
        out_shape=(
            jax.ShapeDtypeStruct((BATCH, 2 * NUM_CLASSES), jnp.float32),  # [enc|aux] logits
            jax.ShapeDtypeStruct((4,), jnp.float32),                      # loss terms
        ),
        in_specs=[vmem] * 6,
        out_specs=(vmem, smem),
    )(inputs, labels2d, w1, b1, wcat, b2)

    # single unpack of the (4,) SMEM result
    loss_main, loss_enc, loss_adv, loss_cls = terms

    loss_dict = {
        "main": loss_main,
        "enc": loss_enc,
        "adv": loss_adv,
        "cls": loss_cls,
    }
    logits_dict = {
        "enc": logits_cat[:, :NUM_CLASSES],
        "adv": logits_cat[:, NUM_CLASSES:],
    }
    return loss_dict, logits_dict


# ======================= pure-JAX reference =======================
def reference_forward(inputs, labels, params, *, ce_loss_adv=CE_LOSS_ADV):
    w1, b1, w2, b2, w3, w4 = params
    h = jnp.maximum(inputs @ w1 + b1, 0.0)
    reconst = h @ w2 + b2
    logits_enc = h @ w3
    logits_aux = h @ w4

    loss_rec = jnp.mean((inputs - reconst) ** 2)

    def ce(logits):
        logp = jax.nn.log_softmax(logits, axis=-1)
        return -jnp.mean(jnp.take_along_axis(logp, labels[:, None], axis=-1))

    loss_enc = ce(logits_enc)
    loss_cls = ce(logits_aux)
    if ce_loss_adv:
        loss_adv = -loss_cls
    else:
        uniform = jnp.full_like(logits_aux, 1.0 / logits_aux.shape[1])
        loss_adv = jnp.mean((jax.nn.softmax(logits_aux, axis=-1) - uniform) ** 2)

    return {
        "main": loss_rec + loss_enc + ADV_WEIGHT * loss_adv,
        "enc": loss_enc,
        "adv": loss_adv,
        "cls": CLS_WEIGHT * loss_cls,
    }, {"enc": logits_enc, "adv": logits_aux}


# ======================= main =======================
if __name__ == "__main__":
    key = jax.random.PRNGKey(0)
    k_x, k_lab, k1, k2, k3, k4 = jax.random.split(key, 6)

    inputs = jax.random.normal(k_x, (BATCH, DIM), dtype=jnp.float32)
    labels = jax.random.randint(k_lab, (BATCH,), 0, NUM_CLASSES, dtype=jnp.int32)

    # deterministic synthetic model parameters
    w1 = 0.05 * jax.random.normal(k1, (DIM, HIDDEN), dtype=jnp.float32)
    b1 = jnp.zeros((1, HIDDEN), dtype=jnp.float32)
    w2 = 0.05 * jax.random.normal(k2, (HIDDEN, DIM), dtype=jnp.float32)
    b2 = jnp.zeros((1, DIM), dtype=jnp.float32)
    w3 = 0.05 * jax.random.normal(k3, (HIDDEN, NUM_CLASSES), dtype=jnp.float32)
    w4 = 0.05 * jax.random.normal(k4, (HIDDEN, NUM_CLASSES), dtype=jnp.float32)
    params = (w1, b1, w2, b2, w3, w4)

    loss_dict, logits_dict = custom_loss_forward(inputs, labels, params)
    jax.block_until_ready(loss_dict)

    ref_loss, ref_logits = reference_forward(inputs, labels, params)
    for k in ("main", "enc", "adv", "cls"):
        np.testing.assert_allclose(np.asarray(loss_dict[k]), np.asarray(ref_loss[k]),
                                   rtol=1e-4, atol=1e-5)
    for k in ("enc", "adv"):
        np.testing.assert_allclose(np.asarray(logits_dict[k]), np.asarray(ref_logits[k]),
                                   rtol=1e-4, atol=1e-5)

    print("KERNEL_OK")
</pallas_src>

<mosaic_0001>
module attributes {stable_mosaic.version = 11 : i64} {
  func.func @_fused_kernel(%arg0: memref<8x512xf32, #tpu.memory_space<vmem>>, %arg1: memref<8x1xi32, #tpu.memory_space<vmem>>, %arg2: memref<512x32xf32, #tpu.memory_space<vmem>>, %arg3: memref<1x32xf32, #tpu.memory_space<vmem>>, %arg4: memref<32x520xf32, #tpu.memory_space<vmem>>, %arg5: memref<1x512xf32, #tpu.memory_space<vmem>>, %arg6: memref<8x8xf32, #tpu.memory_space<vmem>>, %arg7: memref<4xf32, #tpu.memory_space<smem>>) attributes {dimension_semantics = [], scalar_prefetch = 0 : i64, scratch_operands = 0 : i64, tpu.core_type = #tpu.core_type<tc>} {
    %c0 = arith.constant 0 : index
    %c0_0 = arith.constant 0 : index
    %0 = vector.load %arg0[%c0, %c0_0] : memref<8x512xf32, #tpu.memory_space<vmem>>, vector<8x512xf32>
    %c0_1 = arith.constant 0 : index
    %c0_2 = arith.constant 0 : index
    %1 = vector.load %arg2[%c0_1, %c0_2] : memref<512x32xf32, #tpu.memory_space<vmem>>, vector<512x32xf32>
    %cst = arith.constant dense<0.000000e+00> : vector<8x32xf32>
    %2 = tpu.matmul %0, %1, %cst {dimension_numbers = #tpu.dot_dimension_numbers<[1], [0], [0], [1], [0, 0, 1, 1], [], []>} : vector<8x512xf32>, vector<512x32xf32>, vector<8x32xf32> -> vector<8x32xf32>
    %c0_3 = arith.constant 0 : index
    %c0_4 = arith.constant 0 : index
    %3 = vector.load %arg3[%c0_3, %c0_4] : memref<1x32xf32, #tpu.memory_space<vmem>>, vector<1x32xf32>
    %4 = vector.broadcast %3 : vector<1x32xf32> to vector<8x32xf32>
    %5 = arith.addf %2, %4 : vector<8x32xf32>
    %cst_5 = arith.constant 0.000000e+00 : f32
    %6 = vector.broadcast %cst_5 : f32 to vector<8x32xf32>
    %7 = arith.maximumf %5, %6 : vector<8x32xf32>
    %c0_6 = arith.constant 0 : index
    %c0_7 = arith.constant 0 : index
    %8 = vector.load %arg4[%c0_6, %c0_7] : memref<32x520xf32, #tpu.memory_space<vmem>>, vector<32x520xf32>
    %cst_8 = arith.constant dense<0.000000e+00> : vector<8x520xf32>
    %9 = tpu.matmul %7, %8, %cst_8 {dimension_numbers = #tpu.dot_dimension_numbers<[1], [0], [0], [1], [0, 0, 1, 1], [], []>} : vector<8x32xf32>, vector<32x520xf32>, vector<8x520xf32> -> vector<8x520xf32>
    %10 = vector.extract_strided_slice %9 {offsets = [0, 0], sizes = [8, 512], strides = [1, 1]} : vector<8x520xf32> to vector<8x512xf32>
    %c0_9 = arith.constant 0 : index
    %c0_10 = arith.constant 0 : index
    %11 = vector.load %arg5[%c0_9, %c0_10] : memref<1x512xf32, #tpu.memory_space<vmem>>, vector<1x512xf32>
    %12 = vector.broadcast %11 : vector<1x512xf32> to vector<8x512xf32>
    %13 = arith.addf %10, %12 : vector<8x512xf32>
    %14 = vector.extract_strided_slice %9 {offsets = [0, 512], sizes = [8, 8], strides = [1, 1]} : vector<8x520xf32> to vector<8x8xf32>
    %c0_11 = arith.constant 0 : index
    %c0_12 = arith.constant 0 : index
    %15 = vector.load %arg6[%c0_11, %c0_12] : memref<8x8xf32, #tpu.memory_space<vmem>>, vector<8x8xf32>
    tpu.vector_store %arg6[%c0_11, %c0_12], %14 {strides = array<i32>} : memref<8x8xf32, #tpu.memory_space<vmem>>, vector<8x8xf32>,
    %16 = vector.extract_strided_slice %14 {offsets = [0, 0], sizes = [8, 4], strides = [1, 1]} : vector<8x8xf32> to vector<8x4xf32>
    %17 = vector.extract_strided_slice %14 {offsets = [0, 4], sizes = [8, 4], strides = [1, 1]} : vector<8x8xf32> to vector<8x4xf32>
    %c0_13 = arith.constant 0 : index
    %c0_14 = arith.constant 0 : index
    %18 = vector.load %arg1[%c0_13, %c0_14] : memref<8x1xi32, #tpu.memory_space<vmem>>, vector<8x1xi32>
    %19 = tpu.iota {dimensions = array<i32: 1>} : vector<8x4xi32>
    %20 = vector.broadcast %18 : vector<8x1xi32> to vector<8x4xi32>
    %21 = arith.cmpi eq, %19, %20 : vector<8x4xi32>
    %22 = arith.extui %21 : vector<8x4xi1> to vector<8x4xi32>
    %23 = arith.sitofp %22 : vector<8x4xi32> to vector<8x4xf32>
    %24 = arith.subf %0, %13 : vector<8x512xf32>
    %25 = arith.mulf %24, %24 : vector<8x512xf32>
    %26 = vector.shape_cast %25 : vector<8x512xf32> to vector<1x8x512xf32>
    %cst_15 = arith.constant dense<0.000000e+00> : vector<1xf32>
    %27 = vector.multi_reduction <add>, %26, %cst_15 [1, 2] : vector<1x8x512xf32> to vector<1xf32>
    %28 = vector.shape_cast %27 : vector<1xf32> to vector<1x1x1xf32>
    %29 = vector.extract %28[0, 0, 0] : f32 from vector<1x1x1xf32>
    %cst_16 = arith.constant 2.44140625E-4 : f32
    %30 = arith.mulf %29, %cst_16 : f32
    %cst_17 = arith.constant dense<0xFF800000> : vector<8xf32>
    %31 = vector.multi_reduction <maximumf>, %16, %cst_17 [1] : vector<8x4xf32> to vector<8xf32>
    %32 = vector.shape_cast %31 : vector<8xf32> to vector<8x1xf32>
    %33 = vector.broadcast %32 : vector<8x1xf32> to vector<8x4xf32>
    %34 = arith.subf %16, %33 : vector<8x4xf32>
    %35 = math.exp %34 : vector<8x4xf32>
    %cst_18 = arith.constant dense<0.000000e+00> : vector<8xf32>
    %36 = vector.multi_reduction <add>, %35, %cst_18 [1] : vector<8x4xf32> to vector<8xf32>
    %37 = vector.shape_cast %36 : vector<8xf32> to vector<8x1xf32>
    %38 = math.log %37 : vector<8x1xf32>
    %39 = vector.broadcast %38 : vector<8x1xf32> to vector<8x4xf32>
    %40 = arith.subf %39, %34 : vector<8x4xf32>
    %41 = arith.mulf %40, %23 : vector<8x4xf32>
    %cst_19 = arith.constant dense<0.000000e+00> : vector<8xf32>
    %42 = vector.multi_reduction <add>, %41, %cst_19 [1] : vector<8x4xf32> to vector<8xf32>
    %43 = vector.shape_cast %42 : vector<8xf32> to vector<8x1xf32>
    %44 = vector.shape_cast %43 : vector<8x1xf32> to vector<1x8x1xf32>
    %cst_20 = arith.constant dense<0.000000e+00> : vector<1xf32>
    %45 = vector.multi_reduction <add>, %44, %cst_20 [1, 2] : vector<1x8x1xf32> to vector<1xf32>
    %46 = vector.shape_cast %45 : vector<1xf32> to vector<1x1x1xf32>
    %47 = vector.extract %46[0, 0, 0] : f32 from vector<1x1x1xf32>
    %cst_21 = arith.constant 1.250000e-01 : f32
    %48 = arith.mulf %47, %cst_21 : f32
    %cst_22 = arith.constant dense<0xFF800000> : vector<8xf32>
    %49 = vector.multi_reduction <maximumf>, %17, %cst_22 [1] : vector<8x4xf32> to vector<8xf32>
    %50 = vector.shape_cast %49 : vector<8xf32> to vector<8x1xf32>
    %51 = vector.broadcast %50 : vector<8x1xf32> to vector<8x4xf32>
    %52 = arith.subf %17, %51 : vector<8x4xf32>
    %53 = math.exp %52 : vector<8x4xf32>
    %cst_23 = arith.constant dense<0.000000e+00> : vector<8xf32>
    %54 = vector.multi_reduction <add>, %53, %cst_23 [1] : vector<8x4xf32> to vector<8xf32>
    %55 = vector.shape_cast %54 : vector<8xf32> to vector<8x1xf32>
    %56 = math.log %55 : vector<8x1xf32>
    %57 = vector.broadcast %56 : vector<8x1xf32> to vector<8x4xf32>
    %58 = arith.subf %57, %52 : vector<8x4xf32>
    %59 = arith.mulf %58, %23 : vector<8x4xf32>
    %cst_24 = arith.constant dense<0.000000e+00> : vector<8xf32>
    %60 = vector.multi_reduction <add>, %59, %cst_24 [1] : vector<8x4xf32> to vector<8xf32>
    %61 = vector.shape_cast %60 : vector<8xf32> to vector<8x1xf32>
    %62 = vector.shape_cast %61 : vector<8x1xf32> to vector<1x8x1xf32>
    %cst_25 = arith.constant dense<0.000000e+00> : vector<1xf32>
    %63 = vector.multi_reduction <add>, %62, %cst_25 [1, 2] : vector<1x8x1xf32> to vector<1xf32>
    %64 = vector.shape_cast %63 : vector<1xf32> to vector<1x1x1xf32>
    %65 = vector.extract %64[0, 0, 0] : f32 from vector<1x1x1xf32>
    %cst_26 = arith.constant 1.250000e-01 : f32
    %66 = arith.mulf %65, %cst_26 : f32
    %cst_27 = arith.constant dense<0xFF800000> : vector<8xf32>
    %67 = vector.multi_reduction <maximumf>, %17, %cst_27 [1] : vector<8x4xf32> to vector<8xf32>
    %68 = vector.shape_cast %67 : vector<8xf32> to vector<8x1xf32>
    %69 = vector.broadcast %68 : vector<8x1xf32> to vector<8x4xf32>
    %70 = arith.subf %17, %69 : vector<8x4xf32>
    %71 = math.exp %70 : vector<8x4xf32>
    %cst_28 = arith.constant dense<0.000000e+00> : vector<8xf32>
    %72 = vector.multi_reduction <add>, %71, %cst_28 [1] : vector<8x4xf32> to vector<8xf32>
    %73 = vector.shape_cast %72 : vector<8xf32> to vector<8x1xf32>
    %74 = tpu.reciprocal %73 : vector<8x1xf32> -> vector<8x1xf32>
    %75 = vector.broadcast %74 : vector<8x1xf32> to vector<8x4xf32>
    %76 = arith.mulf %71, %75 : vector<8x4xf32>
    %cst_29 = arith.constant 2.500000e-01 : f32
    %77 = vector.broadcast %cst_29 : f32 to vector<8x4xf32>
    %78 = arith.subf %76, %77 : vector<8x4xf32>
    %79 = arith.mulf %78, %78 : vector<8x4xf32>
    %80 = vector.shape_cast %79 : vector<8x4xf32> to vector<1x8x4xf32>
    %cst_30 = arith.constant dense<0.000000e+00> : vector<1xf32>
    %81 = vector.multi_reduction <add>, %80, %cst_30 [1, 2] : vector<1x8x4xf32> to vector<1xf32>
    %82 = vector.shape_cast %81 : vector<1xf32> to vector<1x1x1xf32>
    %83 = vector.extract %82[0, 0, 0] : f32 from vector<1x1x1xf32>
    %cst_31 = arith.constant 3.125000e-02 : f32
    %84 = arith.mulf %83, %cst_31 : f32
    %85 = arith.addf %30, %48 : f32
    %cst_32 = arith.constant 1.000000e-01 : f32
    %86 = arith.mulf %cst_32, %84 : f32
    %87 = arith.addf %85, %86 : f32
    %c0_33 = arith.constant 0 : index
    %88 = memref.load %arg7[%c0_33] : memref<4xf32, #tpu.memory_space<smem>>
    memref.store %87, %arg7[%c0_33] : memref<4xf32, #tpu.memory_space<smem>>
    %c1 = arith.constant 1 : index
    %89 = memref.load %arg7[%c1] : memref<4xf32, #tpu.memory_space<smem>>
    memref.store %48, %arg7[%c1] : memref<4xf32, #tpu.memory_space<smem>>
    %c2 = arith.constant 2 : index
    %90 = memref.load %arg7[%c2] : memref<4xf32, #tpu.memory_space<smem>>
    memref.store %84, %arg7[%c2] : memref<4xf32, #tpu.memory_space<smem>>
    %cst_34 = arith.constant 1.000000e+00 : f32
    %91 = arith.mulf %cst_34, %66 : f32
    %c3 = arith.constant 3 : index
    %92 = memref.load %arg7[%c3] : memref<4xf32, #tpu.memory_space<smem>>
    memref.store %91, %arg7[%c3] : memref<4xf32, #tpu.memory_space<smem>>
    return
  }
}

</mosaic_0001>

<llo_original>
// kernel: custom_loss_forward.1
$region0: #{custom_loss_forward.1}
  #allocation0 [shape = 'u32[]', space=smem, size = 0x4, offset = 0x4, fixed_abs, tag = 'smem constant byte address 0x4 - core index']
  #allocation1 [shape = 'u32[144,128]{1,0:T(1,128)}', space=vmem, size = 0x12000, scoped, tag = 'internal scratch']
  %s0 = inlined_call_operand.vmem [shape: f32[8,512], index: 0, kind: input, shape index: {}]
  %s1 = inlined_call_operand.vmem [shape: s32[8,1], index: 1, kind: input, shape index: {}]
  %s2 = inlined_call_operand.vmem [shape: f32[512,32], index: 2, kind: input, shape index: {}]
  %s3 = inlined_call_operand.vmem [shape: f32[1,32], index: 3, kind: input, shape index: {}]
  %s4 = inlined_call_operand.vmem [shape: f32[32,520], index: 4, kind: input, shape index: {}]
  %s5 = inlined_call_operand.vmem [shape: f32[1,512], index: 5, kind: input, shape index: {}]
  %s6 = inlined_call_operand.vmem [shape: f32[8,8], index: 6, kind: output, shape index: {0}]
  %s7 = inlined_call_operand.vmem [shape: f32[4], index: 7, kind: output, shape index: {1}]
  %8 = xla_tuple %s6, %s7
  %s9 = sld [smem:[#allocation0]]
  $region42: #{custom_loss_forward.1} parent=0
    _
  %s11 = ssub.s32 1, %s9
  %s12 = scalar_select 0, %s11, %s9
  $region1: #{custom_loss_forward.1} parent=0
    #allocation2 [shape = 'u8[512]{0}', space=smem, size = 0x200, scoped, tag = 'output window, operand 1, single buffered']
    #allocation3 [shape = 's32[1]{0}', space=sflag, size = 0x4, scoped, tag = 'scoped memory for custom_loss_forward.1']
    %13 = vsyncpa [#allocation3], 0
    // Predicated region
    $region2: #{custom_loss_forward.1} parent=1 // pred_check
      _
    $region3: #{custom_loss_forward.1} parent=1 // pred_check_branch
      %15 = sbr.rel (0) target = $region5
    $region4: #{custom_loss_forward.1} parent=1 // pred_region
      _
    $region5: #{custom_loss_forward.1} parent=1 // pred_fallthru
      _
    // Predicated region
    $region6: #{custom_loss_forward.1} parent=1 // pred_check
      _
    $region7: #{custom_loss_forward.1} parent=1 // pred_check_branch
      %17 = sbr.rel (0) target = $region9
    $region8: #{custom_loss_forward.1} parent=1 // pred_region
      _
    $region9: #{custom_loss_forward.1} parent=1 // pred_fallthru
      _
    // Predicated region
    $region10: #{custom_loss_forward.1} parent=1 // pred_check
      _
    $region11: #{custom_loss_forward.1} parent=1 // pred_check_branch
      %19 = sbr.rel (0) target = $region13
    $region12: #{custom_loss_forward.1} parent=1 // pred_region
      _
    $region13: #{custom_loss_forward.1} parent=1 // pred_fallthru
      _
    // Predicated region
    $region14: #{custom_loss_forward.1} parent=1 // pred_check
      _
    $region15: #{custom_loss_forward.1} parent=1 // pred_check_branch
      %21 = sbr.rel (0) target = $region17
    $region16: #{custom_loss_forward.1} parent=1 // pred_region
      _
    $region17: #{custom_loss_forward.1} parent=1 // pred_fallthru
      _
    // Predicated region
    $region18: #{custom_loss_forward.1} parent=1 // pred_check
      _
    $region19: #{custom_loss_forward.1} parent=1 // pred_check_branch
      %23 = sbr.rel (0) target = $region21
    $region20: #{custom_loss_forward.1} parent=1 // pred_region
      _
    $region21: #{custom_loss_forward.1} parent=1 // pred_fallthru
      _
    // Predicated region
    $region22: #{custom_loss_forward.1} parent=1 // pred_check
      _
    $region23: #{custom_loss_forward.1} parent=1 // pred_check_branch
      %25 = sbr.rel (0) target = $region25
    $region24: #{custom_loss_forward.1} parent=1 // pred_region
      _
    $region25: #{custom_loss_forward.1} parent=1 // pred_fallthru
      _
    %v26 = vld [vmem:[%s0] sm:$0xff]
    %v27 = vld [vmem:[%s0 + $0x8] sm:$0xff]
    %v28 = vld [vmem:[%s0 + $0x10] sm:$0xff]
    %v29 = vld [vmem:[%s0 + $0x18] sm:$0xff]
    %v30 = vld [vmem:[%s2] sm:$0xff]
    %v31 = vld [vmem:[%s2 + $0x8] sm:$0xff]
    %v32 = vld [vmem:[%s2 + $0x10] sm:$0xff]
    %v33 = vld [vmem:[%s2 + $0x18] sm:$0xff]
    %v34 = vld [vmem:[%s2 + $0x20] sm:$0xff]
    %v35 = vld [vmem:[%s2 + $0x28] sm:$0xff]
    %v36 = vld [vmem:[%s2 + $0x30] sm:$0xff]
    %v37 = vld [vmem:[%s2 + $0x38] sm:$0xff]
    %v38 = vld [vmem:[%s2 + $0x40] sm:$0xff]
    %v39 = vld [vmem:[%s2 + $0x48] sm:$0xff]
    %v40 = vld [vmem:[%s2 + $0x50] sm:$0xff]
    %v41 = vld [vmem:[%s2 + $0x58] sm:$0xff]
    %v42 = vld [vmem:[%s2 + $0x60] sm:$0xff]
    %v43 = vld [vmem:[%s2 + $0x68] sm:$0xff]
    %v44 = vld [vmem:[%s2 + $0x70] sm:$0xff]
    %v45 = vld [vmem:[%s2 + $0x78] sm:$0xff]
    %v46 = vld [vmem:[%s2 + $0x80] sm:$0xff]
    %v47 = vld [vmem:[%s2 + $0x88] sm:$0xff]
    %v48 = vld [vmem:[%s2 + $0x90] sm:$0xff]
    %v49 = vld [vmem:[%s2 + $0x98] sm:$0xff]
    %v50 = vld [vmem:[%s2 + $0xa0] sm:$0xff]
    %v51 = vld [vmem:[%s2 + $0xa8] sm:$0xff]
    %v52 = vld [vmem:[%s2 + $0xb0] sm:$0xff]
    %v53 = vld [vmem:[%s2 + $0xb8] sm:$0xff]
    %v54 = vld [vmem:[%s2 + $0xc0] sm:$0xff]
    %v55 = vld [vmem:[%s2 + $0xc8] sm:$0xff]
    %v56 = vld [vmem:[%s2 + $0xd0] sm:$0xff]
    %v57 = vld [vmem:[%s2 + $0xd8] sm:$0xff]
    %v58 = vld [vmem:[%s2 + $0xe0] sm:$0xff]
    %v59 = vld [vmem:[%s2 + $0xe8] sm:$0xff]
    %v60 = vld [vmem:[%s2 + $0xf0] sm:$0xff]
    %v61 = vld [vmem:[%s2 + $0xf8] sm:$0xff]
    %v62 = vld [vmem:[%s2 + $0x100] sm:$0xff]
    %v63 = vld [vmem:[%s2 + $0x108] sm:$0xff]
    %v64 = vld [vmem:[%s2 + $0x110] sm:$0xff]
    %v65 = vld [vmem:[%s2 + $0x118] sm:$0xff]
    %v66 = vld [vmem:[%s2 + $0x120] sm:$0xff]
    %v67 = vld [vmem:[%s2 + $0x128] sm:$0xff]
    %v68 = vld [vmem:[%s2 + $0x130] sm:$0xff]
    %v69 = vld [vmem:[%s2 + $0x138] sm:$0xff]
    %v70 = vld [vmem:[%s2 + $0x140] sm:$0xff]
    %v71 = vld [vmem:[%s2 + $0x148] sm:$0xff]
    %v72 = vld [vmem:[%s2 + $0x150] sm:$0xff]
    %v73 = vld [vmem:[%s2 + $0x158] sm:$0xff]
    %v74 = vld [vmem:[%s2 + $0x160] sm:$0xff]
    %v75 = vld [vmem:[%s2 + $0x168] sm:$0xff]
    %v76 = vld [vmem:[%s2 + $0x170] sm:$0xff]
    %v77 = vld [vmem:[%s2 + $0x178] sm:$0xff]
    %v78 = vld [vmem:[%s2 + $0x180] sm:$0xff]
    %v79 = vld [vmem:[%s2 + $0x188] sm:$0xff]
    %v80 = vld [vmem:[%s2 + $0x190] sm:$0xff]
    %v81 = vld [vmem:[%s2 + $0x198] sm:$0xff]
    %v82 = vld [vmem:[%s2 + $0x1a0] sm:$0xff]
    %v83 = vld [vmem:[%s2 + $0x1a8] sm:$0xff]
    %v84 = vld [vmem:[%s2 + $0x1b0] sm:$0xff]
    %v85 = vld [vmem:[%s2 + $0x1b8] sm:$0xff]
    %v86 = vld [vmem:[%s2 + $0x1c0] sm:$0xff]
    %v87 = vld [vmem:[%s2 + $0x1c8] sm:$0xff]
    %v88 = vld [vmem:[%s2 + $0x1d0] sm:$0xff]
    %v89 = vld [vmem:[%s2 + $0x1d8] sm:$0xff]
    %v90 = vld [vmem:[%s2 + $0x1e0] sm:$0xff]
    %v91 = vld [vmem:[%s2 + $0x1e8] sm:$0xff]
    %v92 = vld [vmem:[%s2 + $0x1f0] sm:$0xff]
    %v93 = vld [vmem:[%s2 + $0x1f8] sm:$0xff]
    %v94 = vld [vmem:[%s3] sm:$0x1]
    %v96 = vlaneseq
    %v97 = vshrl.u32 %v96, 7
    %v98 = vsub.s32 0, %v97
    %v99 = vrot.slane %v94, %v98
    %101 = vmatprep.subr.mxu0 0.0
    %102 = vmatpush1.msra.mxu0 %v30
    %103 = vmatprep.subr.mxu0 0.0
    %104 = vmatpush1.msra.mxu0 %v31
    %105 = vmatprep.subr.mxu0 0.0
    %106 = vmatpush1.msra.mxu0 %v32
    %107 = vmatprep.subr.mxu0 0.0
    %108 = vmatpush1.msra.mxu0 %v33
    %109 = vmatprep.subr.mxu0 0.0
    %110 = vmatpush1.msra.mxu0 %v34
    %111 = vmatprep.subr.mxu0 0.0
    %112 = vmatpush1.msra.mxu0 %v35
    %113 = vmatprep.subr.mxu0 0.0
    %114 = vmatpush1.msra.mxu0 %v36
    %115 = vmatprep.subr.mxu0 0.0
    %116 = vmatpush1.msra.mxu0 %v37
    %117 = vmatprep.subr.mxu0 0.0
    %118 = vmatpush1.msra.mxu0 %v38
    %119 = vmatprep.subr.mxu0 0.0
    %120 = vmatpush1.msra.mxu0 %v39
    %121 = vmatprep.subr.mxu0 0.0
    %122 = vmatpush1.msra.mxu0 %v40
    %123 = vmatprep.subr.mxu0 0.0
    %124 = vmatpush1.msra.mxu0 %v41
    %125 = vmatprep.subr.mxu0 0.0
    %126 = vmatpush1.msra.mxu0 %v42
    %127 = vmatprep.subr.mxu0 0.0
    %128 = vmatpush1.msra.mxu0 %v43
    %129 = vmatprep.subr.mxu0 0.0
    %130 = vmatpush1.msra.mxu0 %v44
    %131 = vmatprep.subr.mxu0 0.0
    %132 = vmatpush1.msra.mxu0 %v45
    %133 = vmatprep.subr.mxu0 0.0
    %134 = vmatpush1.msra.mxu0 %v46
    %135 = vmatprep.subr.mxu0 0.0
    %136 = vmatpush1.msra.mxu0 %v47
    %137 = vmatprep.subr.mxu0 0.0
    %138 = vmatpush1.msra.mxu0 %v48
    %139 = vmatprep.subr.mxu0 0.0
    %140 = vmatpush1.msra.mxu0 %v49
    %141 = vmatprep.subr.mxu0 0.0
    %142 = vmatpush1.msra.mxu0 %v50
    %143 = vmatprep.subr.mxu0 0.0
    %144 = vmatpush1.msra.mxu0 %v51
    %145 = vmatprep.subr.mxu0 0.0
    %146 = vmatpush1.msra.mxu0 %v52
    %147 = vmatprep.subr.mxu0 0.0
    %148 = vmatpush1.msra.mxu0 %v53
    %149 = vmatprep.subr.mxu0 0.0
    %150 = vmatpush1.msra.mxu0 %v54
    %151 = vmatprep.subr.mxu0 0.0
    %152 = vmatpush1.msra.mxu0 %v55
    %153 = vmatprep.subr.mxu0 0.0
    %154 = vmatpush1.msra.mxu0 %v56
    %155 = vmatprep.subr.mxu0 0.0
    %156 = vmatpush1.msra.mxu0 %v57
    %157 = vmatprep.subr.mxu0 0.0
    %158 = vmatpush1.msra.mxu0 %v58
    %159 = vmatprep.subr.mxu0 0.0
    %160 = vmatpush1.msra.mxu0 %v59
    %161 = vmatprep.subr.mxu0 0.0
    %162 = vmatpush1.msra.mxu0 %v60
    %163 = vmatprep.subr.mxu0 0.0
    %164 = vmatpush1.msra.mxu0 %v61
    %165 = vmatprep.mubr.f32.mxu0 %v27
    %166 = vmatmul.mubr.f32.gmra.mrb[0].mxu0 %v26
    %v167 = vpop.f32.mrb[0].mxu0
    %v168 = vadd.f32 %v99, %v167
    %v169 = vpop.f32.mrb[0].mxu0
    %170 = vdwg.mxu0
    %171 = vmatprep.subr.mxu0 0.0
    %172 = vmatpush1.msra.mxu0 %v62
    %173 = vmatprep.subr.mxu0 0.0
    %174 = vmatpush1.msra.mxu0 %v63
    %175 = vmatprep.subr.mxu0 0.0
    %176 = vmatpush1.msra.mxu0 %v64
    %177 = vmatprep.subr.mxu0 0.0
    %178 = vmatpush1.msra.mxu0 %v65
    %179 = vmatprep.subr.mxu0 0.0
    %180 = vmatpush1.msra.mxu0 %v66
    %181 = vmatprep.subr.mxu0 0.0
    %182 = vmatpush1.msra.mxu0 %v67
    %183 = vmatprep.subr.mxu0 0.0
    %184 = vmatpush1.msra.mxu0 %v68
    %185 = vmatprep.subr.mxu0 0.0
    %186 = vmatpush1.msra.mxu0 %v69
    %187 = vmatprep.subr.mxu0 0.0
    %188 = vmatpush1.msra.mxu0 %v70
    %189 = vmatprep.subr.mxu0 0.0
    %190 = vmatpush1.msra.mxu0 %v71
    %191 = vmatprep.subr.mxu0 0.0
    %192 = vmatpush1.msra.mxu0 %v72
    %193 = vmatprep.subr.mxu0 0.0
    %194 = vmatpush1.msra.mxu0 %v73
    %195 = vmatprep.subr.mxu0 0.0
    %196 = vmatpush1.msra.mxu0 %v74
    %197 = vmatprep.subr.mxu0 0.0
    %198 = vmatpush1.msra.mxu0 %v75
    %199 = vmatprep.subr.mxu0 0.0
    %200 = vmatpush1.msra.mxu0 %v76
    %201 = vmatprep.subr.mxu0 0.0
    %202 = vmatpush1.msra.mxu0 %v77
    %203 = vmatprep.subr.mxu0 0.0
    %204 = vmatpush1.msra.mxu0 %v78
    %205 = vmatprep.subr.mxu0 0.0
    %206 = vmatpush1.msra.mxu0 %v79
    %207 = vmatprep.subr.mxu0 0.0
    %208 = vmatpush1.msra.mxu0 %v80
    %209 = vmatprep.subr.mxu0 0.0
    %210 = vmatpush1.msra.mxu0 %v81
    %211 = vmatprep.subr.mxu0 0.0
    %212 = vmatpush1.msra.mxu0 %v82
    %213 = vmatprep.subr.mxu0 0.0
    %214 = vmatpush1.msra.mxu0 %v83
    %215 = vmatprep.subr.mxu0 0.0
    %216 = vmatpush1.msra.mxu0 %v84
    %217 = vmatprep.subr.mxu0 0.0
    %218 = vmatpush1.msra.mxu0 %v85
    %219 = vmatprep.subr.mxu0 0.0
    %220 = vmatpush1.msra.mxu0 %v86
    %221 = vmatprep.subr.mxu0 0.0
    %222 = vmatpush1.msra.mxu0 %v87
    %223 = vmatprep.subr.mxu0 0.0
    %224 = vmatpush1.msra.mxu0 %v88
    %225 = vmatprep.subr.mxu0 0.0
    %226 = vmatpush1.msra.mxu0 %v89
    %227 = vmatprep.subr.mxu0 0.0
    %228 = vmatpush1.msra.mxu0 %v90
    %229 = vmatprep.subr.mxu0 0.0
    %230 = vmatpush1.msra.mxu0 %v91
    %231 = vmatprep.subr.mxu0 0.0
    %232 = vmatpush1.msra.mxu0 %v92
    %233 = vmatprep.subr.mxu0 0.0
    %234 = vmatpush1.msra.mxu0 %v93
    %235 = vmatprep.mubr.f32.mxu0 %v29
    %236 = vmatmul.mubr.f32.gmra.mrb[0].mxu0 %v28
    %v237 = vpop.f32.mrb[0].mxu0
    %v238 = vadd.f32 %v168, %v237
    %v239 = vpop.f32.mrb[0].mxu0
    %240 = vdwg.mxu0
    %v241 = vmax.f32 %v238, 0.0
    %v242 = vld [vmem:[%s4] sm:$0xff]
    %v243 = vld [vmem:[%s4 + $0x8] sm:$0xff]
    %v244 = vld [vmem:[%s4 + $0x10] sm:$0xff]
    %v245 = vld [vmem:[%s4 + $0x18] sm:$0xff]
    %v246 = vld [vmem:[%s4 + $0x20] sm:$0xff]
    %v247 = vld [vmem:[%s4 + $0x28] sm:$0xff]
    %v248 = vld [vmem:[%s4 + $0x30] sm:$0xff]
    %v249 = vld [vmem:[%s4 + $0x38] sm:$0xff]
    %v250 = vld [vmem:[%s4 + $0x40] sm:$0xff]
    %v251 = vld [vmem:[%s4 + $0x48] sm:$0xff]
    %v252 = vld [vmem:[%s4 + $0x50] sm:$0xff]
    %v253 = vld [vmem:[%s4 + $0x58] sm:$0xff]
    %v254 = vld [vmem:[%s4 + $0x60] sm:$0xff]
    %v255 = vld [vmem:[%s4 + $0x68] sm:$0xff]
    %v256 = vld [vmem:[%s4 + $0x70] sm:$0xff]
    %v257 = vld [vmem:[%s4 + $0x78] sm:$0xff]
    %v258 = vld [vmem:[%s4 + $0x80] sm:$0xff]
    %v259 = vld [vmem:[%s4 + $0x88] sm:$0xff]
    %v260 = vld [vmem:[%s4 + $0x90] sm:$0xff]
    %v261 = vld [vmem:[%s4 + $0x98] sm:$0xff]
    %vm262 = vcmask 261120
    %v264 = vsel %vm262, %v241, 0
    %266 = vmatprep.subr.mxu0 %v243
    %267 = vmatpush1.msra.mxu0 %v242
    %268 = vmatprep.subr.mxu0 %v248
    %269 = vmatpush1.msra.mxu0 %v247
    %270 = vmatprep.subr.mxu0 %v253
    %271 = vmatpush1.msra.mxu0 %v252
    %272 = vmatprep.subr.mxu0 %v258
    %273 = vmatpush1.msra.mxu0 %v257
    %274 = vmatprep.subr.mxu0 0.0
    %275 = vmatpush1.msra.mxu0 0.0
    %276 = vmatprep.subr.mxu0 0.0
    %277 = vmatpush1.msra.mxu0 0.0
    %278 = vmatprep.subr.mxu0 0.0
    %279 = vmatpush1.msra.mxu0 0.0
    %280 = vmatprep.subr.mxu0 0.0
    %281 = vmatpush1.msra.mxu0 0.0
    %282 = vmatprep.subr.mxu0 0.0
    %283 = vmatpush1.msra.mxu0 0.0
    %284 = vmatprep.subr.mxu0 0.0
    %285 = vmatpush1.msra.mxu0 0.0
    %286 = vmatprep.subr.mxu0 0.0
    %287 = vmatpush1.msra.mxu0 0.0
    %288 = vmatprep.subr.mxu0 0.0
    %289 = vmatpush1.msra.mxu0 0.0
    %290 = vmatprep.subr.mxu0 0.0
    %291 = vmatpush1.msra.mxu0 0.0
    %292 = vmatprep.subr.mxu0 0.0
    %293 = vmatpush1.msra.mxu0 0.0
    %294 = vmatprep.subr.mxu0 0.0
    %295 = vmatpush1.msra.mxu0 0.0
    %296 = vmatprep.subr.mxu0 0.0
    %297 = vmatpush1.msra.mxu0 0.0
    %298 = vmatprep.subr.mxu0 0.0
    %299 = vmatpush1.msra.mxu0 0.0
    %300 = vmatprep.subr.mxu0 0.0
    %301 = vmatpush1.msra.mxu0 0.0
    %302 = vmatprep.subr.mxu0 0.0
    %303 = vmatpush1.msra.mxu0 0.0
    %304 = vmatprep.subr.mxu0 0.0
    %305 = vmatpush1.msra.mxu0 0.0
    %306 = vmatprep.subr.mxu0 0.0
    %307 = vmatpush1.msra.mxu0 0.0
    %308 = vmatprep.subr.mxu0 0.0
    %309 = vmatpush1.msra.mxu0 0.0
    %310 = vmatprep.subr.mxu0 0.0
    %311 = vmatpush1.msra.mxu0 0.0
    %312 = vmatprep.subr.mxu0 0.0
    %313 = vmatpush1.msra.mxu0 0.0
    %314 = vmatprep.subr.mxu0 0.0
    %315 = vmatpush1.msra.mxu0 0.0
    %316 = vmatprep.subr.mxu0 0.0
    %317 = vmatpush1.msra.mxu0 0.0
    %318 = vmatprep.subr.mxu0 0.0
    %319 = vmatpush1.msra.mxu0 0.0
    %320 = vmatprep.subr.mxu0 0.0
    %321 = vmatpush1.msra.mxu0 0.0
    %322 = vmatprep.subr.mxu0 0.0
    %323 = vmatpush1.msra.mxu0 0.0
    %324 = vmatprep.subr.mxu0 0.0
    %325 = vmatpush1.msra.mxu0 0.0
    %326 = vmatprep.subr.mxu0 0.0
    %327 = vmatpush1.msra.mxu0 0.0
    %328 = vmatprep.subr.mxu0 0.0
    %329 = vmatpush1.msra.mxu0 0.0
    %330 = vmatprep.mubr.f32.mxu0 0.0
    %331 = vmatmul.mubr.f32.gmra.mrb[0].mxu0 %v264
    %v332 = vpop.f32.mrb[0].mxu0
    %v333 = vadd.f32 0.0, %v332
    %v334 = vpop.f32.mrb[0].mxu0
    %v335 = vadd.f32 0.0, %v334
    %336 = vdwg.mxu0
    %337 = vmatprep.subr.mxu0 %v245
    %338 = vmatpush1.msra.mxu0 %v244
    %339 = vmatprep.subr.mxu0 %v250
    %340 = vmatpush1.msra.mxu0 %v249
    %341 = vmatprep.subr.mxu0 %v255
    %342 = vmatpush1.msra.mxu0 %v254
    %343 = vmatprep.subr.mxu0 %v260
    %344 = vmatpush1.msra.mxu0 %v259
    %345 = vmatprep.subr.mxu0 0.0
    %346 = vmatpush1.msra.mxu0 0.0
    %347 = vmatprep.subr.mxu0 0.0
    %348 = vmatpush1.msra.mxu0 0.0
    %349 = vmatprep.subr.mxu0 0.0
    %350 = vmatpush1.msra.mxu0 0.0
    %351 = vmatprep.subr.mxu0 0.0
    %352 = vmatpush1.msra.mxu0 0.0
    %353 = vmatprep.subr.mxu0 0.0
    %354 = vmatpush1.msra.mxu0 0.0
    %355 = vmatprep.subr.mxu0 0.0
    %356 = vmatpush1.msra.mxu0 0.0
    %357 = vmatprep.subr.mxu0 0.0
    %358 = vmatpush1.msra.mxu0 0.0
    %359 = vmatprep.subr.mxu0 0.0
    %360 = vmatpush1.msra.mxu0 0.0
    %361 = vmatprep.subr.mxu0 0.0
    %362 = vmatpush1.msra.mxu0 0.0
    %363 = vmatprep.subr.mxu0 0.0
    %364 = vmatpush1.msra.mxu0 0.0
    %365 = vmatprep.subr.mxu0 0.0
    %366 = vmatpush1.msra.mxu0 0.0
    %367 = vmatprep.subr.mxu0 0.0
    %368 = vmatpush1.msra.mxu0 0.0
    %369 = vmatprep.subr.mxu0 0.0
    %370 = vmatpush1.msra.mxu0 0.0
    %371 = vmatprep.subr.mxu0 0.0
    %372 = vmatpush1.msra.mxu0 0.0
    %373 = vmatprep.subr.mxu0 0.0
    %374 = vmatpush1.msra.mxu0 0.0
    %375 = vmatprep.subr.mxu0 0.0
    %376 = vmatpush1.msra.mxu0 0.0
    %377 = vmatprep.subr.mxu0 0.0
    %378 = vmatpush1.msra.mxu0 0.0
    %379 = vmatprep.subr.mxu0 0.0
    %380 = vmatpush1.msra.mxu0 0.0
    %381 = vmatprep.subr.mxu0 0.0
    %382 = vmatpush1.msra.mxu0 0.0
    %383 = vmatprep.subr.mxu0 0.0
    %384 = vmatpush1.msra.mxu0 0.0
    %385 = vmatprep.subr.mxu0 0.0
    %386 = vmatpush1.msra.mxu0 0.0
    %387 = vmatprep.subr.mxu0 0.0
    %388 = vmatpush1.msra.mxu0 0.0
    %389 = vmatprep.subr.mxu0 0.0
    %390 = vmatpush1.msra.mxu0 0.0
    %391 = vmatprep.subr.mxu0 0.0
    %392 = vmatpush1.msra.mxu0 0.0
    %393 = vmatprep.subr.mxu0 0.0
    %394 = vmatpush1.msra.mxu0 0.0
    %395 = vmatprep.subr.mxu0 0.0
    %396 = vmatpush1.msra.mxu0 0.0
    %397 = vmatprep.subr.mxu0 0.0
    %398 = vmatpush1.msra.mxu0 0.0
    %399 = vmatprep.subr.mxu0 0.0
    %400 = vmatpush1.msra.mxu0 0.0
    %401 = vmatprep.mubr.f32.mxu0 0.0
    %402 = vmatmul.mubr.f32.gmra.mrb[0].mxu0 %v264
    %v403 = vpop.f32.mrb[0].mxu0
    %v404 = vadd.f32 0.0, %v403
    %v405 = vpop.f32.mrb[0].mxu0
    %v406 = vadd.f32 0.0, %v405
    %407 = vdwg.mxu0
    %408 = vmatprep.subr.mxu0 0.0
    %409 = vmatpush1.msra.mxu0 %v246
    %410 = vmatprep.subr.mxu0 0.0
    %411 = vmatpush1.msra.mxu0 %v251
    %412 = vmatprep.subr.mxu0 0.0
    %413 = vmatpush1.msra.mxu0 %v256
    %414 = vmatprep.subr.mxu0 0.0
    %415 = vmatpush1.msra.mxu0 %v261
    %416 = vmatprep.subr.mxu0 0.0
    %417 = vmatpush1.msra.mxu0 0.0
    %418 = vmatprep.subr.mxu0 0.0
    %419 = vmatpush1.msra.mxu0 0.0
    %420 = vmatprep.subr.mxu0 0.0
    %421 = vmatpush1.msra.mxu0 0.0
    %422 = vmatprep.subr.mxu0 0.0
    %423 = vmatpush1.msra.mxu0 0.0
    %424 = vmatprep.subr.mxu0 0.0
    %425 = vmatpush1.msra.mxu0 0.0
    %426 = vmatprep.subr.mxu0 0.0
    %427 = vmatpush1.msra.mxu0 0.0
    %428 = vmatprep.subr.mxu0 0.0
    %429 = vmatpush1.msra.mxu0 0.0
    %430 = vmatprep.subr.mxu0 0.0
    %431 = vmatpush1.msra.mxu0 0.0
    %432 = vmatprep.subr.mxu0 0.0
    %433 = vmatpush1.msra.mxu0 0.0
    %434 = vmatprep.subr.mxu0 0.0
    %435 = vmatpush1.msra.mxu0 0.0
    %436 = vmatprep.subr.mxu0 0.0
    %437 = vmatpush1.msra.mxu0 0.0
    %438 = vmatprep.subr.mxu0 0.0
    %439 = vmatpush1.msra.mxu0 0.0
    %440 = vmatprep.subr.mxu0 0.0
    %441 = vmatpush1.msra.mxu0 0.0
    %442 = vmatprep.subr.mxu0 0.0
    %443 = vmatpush1.msra.mxu0 0.0
    %444 = vmatprep.subr.mxu0 0.0
    %445 = vmatpush1.msra.mxu0 0.0
    %446 = vmatprep.subr.mxu0 0.0
    %447 = vmatpush1.msra.mxu0 0.0
    %448 = vmatprep.subr.mxu0 0.0
    %449 = vmatpush1.msra.mxu0 0.0
    %450 = vmatprep.subr.mxu0 0.0
    %451 = vmatpush1.msra.mxu0 0.0
    %452 = vmatprep.subr.mxu0 0.0
    %453 = vmatpush1.msra.mxu0 0.0
    %454 = vmatprep.subr.mxu0 0.0
    %455 = vmatpush1.msra.mxu0 0.0
    %456 = vmatprep.subr.mxu0 0.0
    %457 = vmatpush1.msra.mxu0 0.0
    %458 = vmatprep.subr.mxu0 0.0
    %459 = vmatpush1.msra.mxu0 0.0
    %460 = vmatprep.subr.mxu0 0.0
    %461 = vmatpush1.msra.mxu0 0.0
    %462 = vmatprep.subr.mxu0 0.0
    %463 = vmatpush1.msra.mxu0 0.0
    %464 = vmatprep.subr.mxu0 0.0
    %465 = vmatpush1.msra.mxu0 0.0
    %466 = vmatprep.subr.mxu0 0.0
    %467 = vmatpush1.msra.mxu0 0.0
    %468 = vmatprep.subr.mxu0 0.0
    %469 = vmatpush1.msra.mxu0 0.0
    %470 = vmatprep.subr.mxu0 0.0
    %471 = vmatpush1.msra.mxu0 0.0
    %472 = vmatprep.mubr.f32.mxu0 0.0
    %473 = vmatmul.mubr.f32.gmra.mrb[0].mxu0 %v264
    %v474 = vpop.f32.mrb[0].mxu0
    %v475 = vadd.f32 0.0, %v474
    %v476 = vpop.f32.mrb[0].mxu0
    %477 = vdwg.mxu0
    %v478 = vld [vmem:[%s5] sm:$0xf]
    %v480 = vlaneseq
    %v481 = vshrl.u32 %v480, 7
    %v482 = vsub.s32 0, %v481
    %v483 = vrot.slane %v478, %v482
    %v484 = vlaneseq
    %v485 = vshrl.u32 %v484, 7
    %v486 = vsub.s32 1, %v485
    %v487 = vrot.slane %v478, %v486
    %v488 = vlaneseq
    %v489 = vshrl.u32 %v488, 7
    %v490 = vsub.s32 2, %v489
    %v491 = vrot.slane %v478, %v490
    %v492 = vlaneseq
    %v493 = vshrl.u32 %v492, 7
    %v494 = vsub.s32 3, %v493
    %v495 = vrot.slane %v478, %v494
    %v500 = vadd.f32 %v333, %v483
    %v501 = vadd.f32 %v335, %v487
    %v502 = vadd.f32 %v404, %v491
    %v503 = vadd.f32 %v406, %v495
    %vm504 = vcmask 64512
    %505 = vst.msk [vmem:[%s6] sm:$0xff] %vm504, %v475
    %v506 = vld [vmem:[%s1] sm:$0xff]
    %v507 = vlaneseq
    %v508 = vand.u32 %v507, 127
    %509 = vset.pattern.permute.xlu0 0
    %510 = vperm.xlu0 %509, %v506
    %v511 = vpop.permute.xlu0 %510
    %vm512 = vcmp.eq.s32.totalorder %v508, %v511
    %v513 = vsel %vm512, 1, 0
    %v514 = vcvt.s32.f32 %v513
    %v515 = vsub.f32 %v26, %v500
    %v516 = vsub.f32 %v27, %v501
    %v517 = vsub.f32 %v28, %v502
    %v518 = vsub.f32 %v29, %v503
    %v519 = vmul.f32 %v515, %v515
    %v520 = vmul.f32 %v516, %v516
    %v521 = vmul.f32 %v517, %v517
    %v522 = vmul.f32 %v518, %v518
    %v523 = vadd.f32 %v519, %v520
    %v524 = vadd.f32 %v523, %v521
    %v525 = vadd.f32 %v524, %v522
    %526 = vadd.xlane.f32.xlu0 %v525
    %v527 = vpop.xlane.xlu0 %526
    %v528 = vrot.slane %v527, 4
    %v529 = vadd.f32 %v527, %v528
    %v530 = vrot.slane %v529, 2
    %v531 = vadd.f32 %v529, %v530
    %v532 = vrot.slane %v531, 1
    %v533 = vadd.f32 %v531, %v532
    %s534 = vtos %v533
    %s535 = smul.f32 %s534, 0.00024414063
    %vm536 = vcmask 31744
    %v537 = vsel %vm536, %v475, -inf
    %538 = vmax.xlane.f32.xlu0 %v537
    %v539 = vpop.xlane.xlu0 %538
    %v540 = vsub.f32 %v475, %v539
    %v541 = vmul.f32 %v540, 1.442695
    %v542 = vpow.pop %v541
    %v543 = vsel %vm536, %v542, 0.0
    %544 = vadd.xlane.f32.xlu0 %v543
    %v545 = vpop.xlane.xlu0 %544
    %v546 = vlog2.pop %v545
    %v547 = vmul.f32 %v546, 0.6931472
    %v548 = vsub.f32 %v547, %v540
    %v549 = vmul.f32 %v548, %v514
    %v550 = vsel %vm536, %v549, 0.0
    %551 = vadd.xlane.f32.xlu0 %v550
    %v552 = vpop.xlane.xlu0 %551
    %vm553 = vcmask 7168
    %v554 = vsel %vm553, %v552, 0.0
    %555 = vadd.xlane.f32.xlu0 %v554
    %v556 = vpop.xlane.xlu0 %555
    %v557 = vrot.slane %v556, 4
    %v558 = vadd.f32 %v556, %v557
    %v559 = vrot.slane %v558, 2
    %v560 = vadd.f32 %v558, %v559
    %v561 = vrot.slane %v560, 1
    %v562 = vadd.f32 %v560, %v561
    %s563 = vtos %v562
    %s564 = smul.f32 %s563, 0.125
    %vm565 = vcmask 64544
    %v566 = vsel %vm565, %v475, -inf
    %567 = vmax.xlane.f32.xlu0 %v566
    %v568 = vpop.xlane.xlu0 %567
    %v569 = vsub.f32 %v475, %v568
    %v570 = vmul.f32 %v569, 1.442695
    %v571 = vpow.pop %v570
    %573 = vrot.lane.b32.xlu0 %v571, 124
    %v574 = vpop.permute.xlu0 %573
    %v576 = vsel %vm536, %v574, 0.0
    %577 = vadd.xlane.f32.xlu0 %v576
    %v578 = vpop.xlane.xlu0 %577
    %v579 = vlog2.pop %v578
    %v580 = vmul.f32 %v579, 0.6931472
    %v581 = vsub.f32 %v580, %v569
    %583 = vrot.lane.b32.xlu0 %v514, 4
    %v584 = vpop.permute.xlu0 %583
    %v586 = vmul.f32 %v581, %v584
    %588 = vrot.lane.b32.xlu0 %v586, 124
    %v589 = vpop.permute.xlu0 %588
    %v591 = vsel %vm536, %v589, 0.0
    %592 = vadd.xlane.f32.xlu0 %v591
    %v593 = vpop.xlane.xlu0 %592
    %v594 = vsel %vm553, %v593, 0.0
    %595 = vadd.xlane.f32.xlu0 %v594
    %v596 = vpop.xlane.xlu0 %595
    %v597 = vrot.slane %v596, 4
    %v598 = vadd.f32 %v596, %v597
    %v599 = vrot.slane %v598, 2
    %v600 = vadd.f32 %v598, %v599
    %v601 = vrot.slane %v600, 1
    %v602 = vadd.f32 %v600, %v601
    %s603 = vtos %v602
    %s604 = smul.f32 %s603, 0.125
    %v605 = vrcp.pop %v578
    %v606 = vmul.f32 %v571, %v605
    %v607 = vsub.f32 %v606, 0.25
    %v608 = vmul.f32 %v607, %v607
    %610 = vrot.lane.b32.xlu0 %v608, 124
    %v611 = vpop.permute.xlu0 %610
    %v613 = vsel %vm536, %v611, 0.0
    %614 = vadd.xlane.f32.xlu0 %v613
    %v615 = vpop.xlane.xlu0 %614
    %v616 = vrot.slane %v615, 4
    %v617 = vadd.f32 %v615, %v616
    %v618 = vrot.slane %v617, 2
    %v619 = vadd.f32 %v617, %v618
    %v620 = vrot.slane %v619, 1
    %v621 = vadd.f32 %v619, %v620
    %s622 = vtos %v621
    %s623 = smul.f32 %s622, 0.03125
    %s624 = sadd.f32 %s535, %s564
    %s625 = smul.f32 %s623, 0.1
    %s626 = sadd.f32 %s624, %s625
    %s627 = scalar_lea.smem [#allocation2], 0
    %628 = sst [smem:[%s627]] %s626
    %s629 = scalar_lea.smem [#allocation2], 1
    %630 = sst [smem:[%s629]] %s564
    %s631 = scalar_lea.smem [#allocation2], 2
    %632 = sst [smem:[%s631]] %s623
    %s633 = scalar_lea.smem [#allocation2], 3
    %634 = sst [smem:[%s633]] %s604
    // Predicated region
    $region26: #{custom_loss_forward.1} parent=1 // pred_check
      _
    $region27: #{custom_loss_forward.1} parent=1 // pred_check_branch
      %636 = sbr.rel (0) target = $region29
    $region28: #{custom_loss_forward.1} parent=1 // pred_region
      _
    $region29: #{custom_loss_forward.1} parent=1 // pred_fallthru
      _
    // Predicated region
    $region30: #{custom_loss_forward.1} parent=1 // pred_check
      _
    $region31: #{custom_loss_forward.1} parent=1 // pred_check_branch
      %638 = sbr.rel (0) target = $region33
    $region32: #{custom_loss_forward.1} parent=1 // pred_region
      %s640 = ssub.s32 16, 16
      %641 = vsyncadd [#allocation3], %s640
      %s643 = sshll.u32 %s7, 4
      %s644 = int_to_ptr.vmem [resolvable:$true] %s643
      %646 = dma.smem_to_vmem [#allocation2], 16, %s644, [#allocation3]
    $region33: #{custom_loss_forward.1} parent=1 // pred_fallthru
      _
    // Predicated region
    $region34: #{custom_loss_forward.1} parent=1 // pred_check
      _
    $region35: #{custom_loss_forward.1} parent=1 // pred_check_branch
      %648 = sbr.rel (0) target = $region37
    $region36: #{custom_loss_forward.1} parent=1 // pred_region
      _
    $region37: #{custom_loss_forward.1} parent=1 // pred_fallthru
      _
    // Predicated region
    $region38: #{custom_loss_forward.1} parent=1 // pred_check
      _
    $region39: #{custom_loss_forward.1} parent=1 // pred_check_branch
      %650 = sbr.rel (0) target = $region41
    $region40: #{custom_loss_forward.1} parent=1 // pred_region
      %651 = dma.done [#allocation3], 16
    $region41: #{custom_loss_forward.1} parent=1 // pred_fallthru
      _
    %652 = sfence
    %653 = vsyncpa [#allocation3], 1

</llo_original>
